<compile_context>
chip_gen: v7x
topology: tpu7x:2x2x1
jax: 0.10.0
libtpu: 0.0.40
codegen_flags: <defaults>
</compile_context>

<pallas_src>
import jax
import jax.numpy as jnp
from jax.experimental import pallas as pl
from jax.experimental.pallas import tpu as pltpu

_MIB = 1024 * 1024


def _round_up(n, m):
    return ((n + m - 1) // m) * m


def _vmem_capacity_bytes():
    try:
        return int(pltpu.get_tpu_info().vmem_capacity_bytes)
    except Exception:
        return 64 * _MIB  # conservative fallback: v7x per-TensorCore VMEM


def _choose_tiling(B, T, Hp, itemsize, xbuf_budget_bytes):
    """Pick (blk_b, b_pad, t_chunk, t_pad); all resulting block dims are tile-legal."""
    b_pad = _round_up(B, 8)

    # How many batch rows a single x buffer can hold with the full T axis resident,
    # also keeping the f32 accumulator scratch within one buffer's budget.
    blk_b_cap = xbuf_budget_bytes // max(T * Hp * itemsize, 1)
    blk_b_cap = min(blk_b_cap, xbuf_budget_bytes // max(Hp * 4, 1))

    if blk_b_cap >= 8:
        # Whole T fits alongside >= 8 batch rows: a single T chunk.
        blk_b = min((blk_b_cap // 8) * 8, b_pad, 1024)
        t_chunk, t_pad = T, T
    else:
        # Large T: fix an 8-row batch block and stream T in chunks (online softmax).
        blk_b = min(8, b_pad)
        t_cap = xbuf_budget_bytes // max(blk_b * Hp * itemsize, 1)
        t_chunk = max(8, min((t_cap // 8) * 8, 2048))
        t_pad = _round_up(T, t_chunk)

    # v7x dual-TC: ensure the "parallel" batch axis has >= 2 grid steps when B allows.
    if blk_b >= b_pad and b_pad >= 16:
        blk_b = max(8, ((b_pad // 2) // 8) * 8)

    blk_b = min(blk_b, b_pad)
    b_pad = _round_up(b_pad, blk_b)
    return blk_b, b_pad, t_chunk, t_pad


def _make_kernel(T, t_chunk, t_pad):
    mask_t = (t_pad != T)

    def kernel(x_ref, w_ref, o_ref, m_sc, l_sc, acc_sc):
        t = pl.program_id(1)

        @pl.when(t == 0)
        def _init():
            m_sc[...] = jnp.full_like(m_sc, -jnp.inf)
            l_sc[...] = jnp.zeros_like(l_sc)
            acc_sc[...] = jnp.zeros_like(acc_sc)

        x = x_ref[...]                                   # (blk_b, t_chunk, Hp), native dtype
        w = w_ref[...]                                   # (1, Hp)

        # Scores for this T chunk: VPU broadcast-multiply in the native dtype,
        # f32 lane reduce (XLU). Bias elided: scalar shift is a no-op under softmax.
        s = jnp.sum(x * w[None, :, :].astype(x.dtype), axis=-1,
                    dtype=jnp.float32)                   # (blk_b, t_chunk)
        if mask_t:
            pos = t * t_chunk + jax.lax.broadcasted_iota(jnp.int32, s.shape, 1)
            s = jnp.where(pos < T, s, -1e30)             # padded time steps -> weight 0

        # Online softmax over the T axis.
        m_prev = m_sc[...]                               # (blk_b, 1)
        m_new = jnp.maximum(m_prev, jnp.max(s, axis=1, keepdims=True))
        alpha = jnp.exp(m_prev - m_new)                  # (blk_b, 1)
        p = jnp.exp(s - m_new)                           # (blk_b, t_chunk)
        l_sc[...] = alpha * l_sc[...] + jnp.sum(p, axis=1, keepdims=True)
        acc_sc[...] = alpha * acc_sc[...] + jnp.sum(
            x.astype(jnp.float32) * p[:, :, None], axis=1)   # (blk_b, Hp), f32 accum
        m_sc[...] = m_new

        @pl.when(t == pl.num_programs(1) - 1)
        def _finalize():
            # Exact divide: approx reciprocal buys nothing (HBM-bound) and broke tolerance.
            o_ref[...] = (acc_sc[...] / l_sc[...]).astype(o_ref.dtype)

    return kernel


def temporal_attention(x, w, b=None, *, blk_b=None, t_chunk=None, vmem_limit_bytes=None):
    """x: (B, T, H); w: (1, H) fc weight (PyTorch Linear layout); b: (1,) fc bias.

    The bias is accepted for interface parity but not used inside the kernel: with
    out_features == 1 it is a scalar added to every score, and softmax over the time
    axis is shift-invariant, so it cannot change the output. Returns (B, H).
    """
    B, T, H = x.shape
    assert w.shape == (1, H), "fc weight must be (1, hidden_dim); bias elision relies on out_features == 1"
    del b  # softmax shift-invariance (scalar bias) -> no effect on the output

    itemsize = x.dtype.itemsize

    # Generation-aware VMEM sizing (128 MiB on v5e/v6e, 64 MiB per TC on v7x).
    capacity = _vmem_capacity_bytes()
    if vmem_limit_bytes is None:
        vmem_limit_bytes = 96 * _MIB if capacity >= 128 * _MIB else max(capacity - 8 * _MIB, 32 * _MIB)
    xbuf_budget = vmem_limit_bytes // 4       # per-buffer x tile; double-buffered x ~ half the limit

    # Lane-dense H: pad to a multiple of 128 when needed (unmasked output stores).
    Hp = H if H % 128 == 0 else _round_up(H, 128)

    auto_blk_b, b_pad, auto_t_chunk, t_pad = _choose_tiling(B, T, Hp, itemsize, xbuf_budget)
    if blk_b is None:
        blk_b = auto_blk_b
    else:
        blk_b = max(8, (int(blk_b) // 8) * 8)
        b_pad = _round_up(_round_up(B, 8), blk_b)
    if t_chunk is None:
        t_chunk = auto_t_chunk
    else:
        t_chunk = max(8, (int(t_chunk) // 8) * 8)
        t_pad = _round_up(T, t_chunk)

    pad_b, pad_t, pad_h = b_pad - B, t_pad - T, Hp - H
    x_p = x if not (pad_b or pad_t or pad_h) else jnp.pad(x, ((0, pad_b), (0, pad_t), (0, pad_h)))
    w_p = w if not pad_h else jnp.pad(w, ((0, 0), (0, pad_h)))

    grid = (b_pad // blk_b, t_pad // t_chunk)

    cost = pl.CostEstimate(
        flops=int(4 * b_pad * t_pad * Hp),
        transcendentals=int(b_pad * t_pad),
        bytes_accessed=int(b_pad * t_pad * Hp * itemsize + b_pad * Hp * itemsize + Hp * w.dtype.itemsize),
    )

    out = pl.pallas_call(
        _make_kernel(T, t_chunk, t_pad),
        out_shape=jax.ShapeDtypeStruct((b_pad, Hp), x.dtype),
        grid=grid,
        in_specs=[
            pl.BlockSpec((blk_b, t_chunk, Hp), lambda i, t: (i, t, 0)),  # streamed x tile
            pl.BlockSpec((1, Hp), lambda i, t: (0, 0)),                  # shared fc weight
        ],
        out_specs=pl.BlockSpec((blk_b, Hp), lambda i, t: (i, 0)),        # resident across T axis
        scratch_shapes=[
            pltpu.VMEM((blk_b, 1), jnp.float32),     # running max
            pltpu.VMEM((blk_b, 1), jnp.float32),     # running softmax denominator
            pltpu.VMEM((blk_b, Hp), jnp.float32),    # running weighted sum (f32 acc)
        ],
        compiler_params=pltpu.CompilerParams(
            dimension_semantics=("parallel", "arbitrary"),
            vmem_limit_bytes=int(vmem_limit_bytes),
        ),
        cost_estimate=cost,
    )(x_p, w_p)

    return out[:B, :H] if (pad_b or pad_h) else out


def reference(x, w, b):
    scores = jnp.einsum("bth,oh->bt", x, w) + b[0]            # (B, T)
    weights = jax.nn.softmax(scores, axis=1)[..., None]       # (B, T, 1)
    return jnp.sum(x * weights, axis=1)                       # (B, H)


if __name__ == "__main__":
    B, T, H = 2, 8, 32   # batch, seq, hidden_dim

    key = jax.random.PRNGKey(0)
    kx, kw, kb = jax.random.split(key, 3)

    x = jax.random.normal(kx, (B, T, H), dtype=jnp.float32)
    # Deterministic "Linear(hidden_dim, 1)" parameters (PyTorch-style uniform init bound).
    bound = 1.0 / jnp.sqrt(H)
    w = jax.random.uniform(kw, (1, H), dtype=jnp.float32, minval=-bound, maxval=bound)
    b = jax.random.uniform(kb, (1,), dtype=jnp.float32, minval=-bound, maxval=bound)

    out = temporal_attention(x, w, b)
    out = jax.block_until_ready(out)

    ref = reference(x, w, b)
    assert out.shape == (B, H)
    assert jnp.allclose(out, ref, atol=1e-4, rtol=1e-4), "mismatch vs reference"

    print("KERNEL_OK")
</pallas_src>

<mosaic_0001>
module attributes {stable_mosaic.version = 11 : i64} {
  func.func @kernel(%arg0: i32, %arg1: i32, %arg2: memref<8x8x128xf32, #tpu.memory_space<vmem>>, %arg3: memref<1x128xf32, #tpu.memory_space<vmem>>, %arg4: memref<8x128xf32, #tpu.memory_space<vmem>>, %arg5: memref<8x1xf32, #tpu.memory_space<vmem>>, %arg6: memref<8x1xf32, #tpu.memory_space<vmem>>, %arg7: memref<8x128xf32, #tpu.memory_space<vmem>>) attributes {dimension_semantics = [#tpu.dimension_semantics<parallel>, #tpu.dimension_semantics<arbitrary>], iteration_bounds = array<i64: 1, 1>, scalar_prefetch = 0 : i64, scratch_operands = 3 : i64, tpu.core_type = #tpu.core_type<tc>, window_params = [{transform_indices = @transform_0, window_bounds = array<i64: 8, 8, 128>}, {pipeline_mode = #tpu.pipeline_mode<synchronous>, transform_indices = @transform_1, window_bounds = array<i64: 1, 128>}, {transform_indices = @transform_2, window_bounds = array<i64: 8, 128>}]} {
    %c0_i32 = arith.constant 0 : i32
    %0 = arith.cmpi eq, %arg1, %c0_i32 : i32
    %1 = arith.extui %0 : i1 to i32
    %c0_i32_0 = arith.constant 0 : i32
    %2 = arith.cmpi ne, %1, %c0_i32_0 : i32
    scf.if %2 {
      %cst_22 = arith.constant 0xFF800000 : f32
      %37 = vector.broadcast %cst_22 : f32 to vector<8x1xf32>
      %c0_23 = arith.constant 0 : index
      %c0_24 = arith.constant 0 : index
      %38 = vector.load %arg5[%c0_23, %c0_24] : memref<8x1xf32, #tpu.memory_space<vmem>>, vector<8x1xf32>
      tpu.vector_store %arg5[%c0_23, %c0_24], %37 {strides = array<i32>} : memref<8x1xf32, #tpu.memory_space<vmem>>, vector<8x1xf32>,
      %cst_25 = arith.constant 0.000000e+00 : f32
      %39 = vector.broadcast %cst_25 : f32 to vector<8x1xf32>
      %c0_26 = arith.constant 0 : index
      %c0_27 = arith.constant 0 : index
      %40 = vector.load %arg6[%c0_26, %c0_27] : memref<8x1xf32, #tpu.memory_space<vmem>>, vector<8x1xf32>
      tpu.vector_store %arg6[%c0_26, %c0_27], %39 {strides = array<i32>} : memref<8x1xf32, #tpu.memory_space<vmem>>, vector<8x1xf32>,
      %cst_28 = arith.constant 0.000000e+00 : f32
      %41 = vector.broadcast %cst_28 : f32 to vector<8x128xf32>
      %c0_29 = arith.constant 0 : index
      %c0_30 = arith.constant 0 : index
      %42 = vector.load %arg7[%c0_29, %c0_30] : memref<8x128xf32, #tpu.memory_space<vmem>>, vector<8x128xf32>
      tpu.vector_store %arg7[%c0_29, %c0_30], %41 {strides = array<i32>} : memref<8x128xf32, #tpu.memory_space<vmem>>, vector<8x128xf32>,
    } else {
    }
    %c0 = arith.constant 0 : index
    %c0_1 = arith.constant 0 : index
    %c0_2 = arith.constant 0 : index
    %3 = vector.load %arg2[%c0, %c0_1, %c0_2] : memref<8x8x128xf32, #tpu.memory_space<vmem>>, vector<8x8x128xf32>
    %c0_3 = arith.constant 0 : index
    %c0_4 = arith.constant 0 : index
    %4 = vector.load %arg3[%c0_3, %c0_4] : memref<1x128xf32, #tpu.memory_space<vmem>>, vector<1x128xf32>
    %5 = vector.shape_cast %4 : vector<1x128xf32> to vector<1x1x128xf32>
    %6 = vector.broadcast %5 : vector<1x1x128xf32> to vector<8x8x128xf32>
    %7 = arith.mulf %3, %6 : vector<8x8x128xf32>
    %cst = arith.constant dense<0.000000e+00> : vector<8x8xf32>
    %8 = vector.multi_reduction <add>, %7, %cst [2] : vector<8x8x128xf32> to vector<8x8xf32>
    %c0_5 = arith.constant 0 : index
    %c0_6 = arith.constant 0 : index
    %9 = vector.load %arg5[%c0_5, %c0_6] : memref<8x1xf32, #tpu.memory_space<vmem>>, vector<8x1xf32>
    %cst_7 = arith.constant dense<0xFF800000> : vector<8xf32>
    %10 = vector.multi_reduction <maximumf>, %8, %cst_7 [1] : vector<8x8xf32> to vector<8xf32>
    %11 = vector.shape_cast %10 : vector<8xf32> to vector<8x1xf32>
    %12 = arith.maximumf %9, %11 : vector<8x1xf32>
    %13 = arith.subf %9, %12 : vector<8x1xf32>
    %14 = math.exp %13 : vector<8x1xf32>
    %15 = vector.broadcast %12 : vector<8x1xf32> to vector<8x8xf32>
    %16 = arith.subf %8, %15 : vector<8x8xf32>
    %17 = math.exp %16 : vector<8x8xf32>
    %c0_8 = arith.constant 0 : index
    %c0_9 = arith.constant 0 : index
    %18 = vector.load %arg6[%c0_8, %c0_9] : memref<8x1xf32, #tpu.memory_space<vmem>>, vector<8x1xf32>
    %19 = arith.mulf %14, %18 : vector<8x1xf32>
    %cst_10 = arith.constant dense<0.000000e+00> : vector<8xf32>
    %20 = vector.multi_reduction <add>, %17, %cst_10 [1] : vector<8x8xf32> to vector<8xf32>
    %21 = vector.shape_cast %20 : vector<8xf32> to vector<8x1xf32>
    %22 = arith.addf %19, %21 : vector<8x1xf32>
    %c0_11 = arith.constant 0 : index
    %c0_12 = arith.constant 0 : index
    %23 = vector.load %arg6[%c0_11, %c0_12] : memref<8x1xf32, #tpu.memory_space<vmem>>, vector<8x1xf32>
    tpu.vector_store %arg6[%c0_11, %c0_12], %22 {strides = array<i32>} : memref<8x1xf32, #tpu.memory_space<vmem>>, vector<8x1xf32>,
    %c0_13 = arith.constant 0 : index
    %c0_14 = arith.constant 0 : index
    %24 = vector.load %arg7[%c0_13, %c0_14] : memref<8x128xf32, #tpu.memory_space<vmem>>, vector<8x128xf32>
    %25 = vector.broadcast %14 : vector<8x1xf32> to vector<8x128xf32>
    %26 = arith.mulf %25, %24 : vector<8x128xf32>
    %27 = vector.shape_cast %17 : vector<8x8xf32> to vector<8x8x1xf32>
    %28 = vector.broadcast %27 : vector<8x8x1xf32> to vector<8x8x128xf32>
    %29 = arith.mulf %3, %28 : vector<8x8x128xf32>
    %cst_15 = arith.constant dense<0.000000e+00> : vector<8x128xf32>
    %30 = vector.multi_reduction <add>, %29, %cst_15 [1] : vector<8x8x128xf32> to vector<8x128xf32>
    %31 = arith.addf %26, %30 : vector<8x128xf32>
    %c0_16 = arith.constant 0 : index
    %c0_17 = arith.constant 0 : index
    %32 = vector.load %arg7[%c0_16, %c0_17] : memref<8x128xf32, #tpu.memory_space<vmem>>, vector<8x128xf32>
    tpu.vector_store %arg7[%c0_16, %c0_17], %31 {strides = array<i32>} : memref<8x128xf32, #tpu.memory_space<vmem>>, vector<8x128xf32>,
    %c0_18 = arith.constant 0 : index
    %c0_19 = arith.constant 0 : index
    %33 = vector.load %arg5[%c0_18, %c0_19] : memref<8x1xf32, #tpu.memory_space<vmem>>, vector<8x1xf32>
    tpu.vector_store %arg5[%c0_18, %c0_19], %12 {strides = array<i32>} : memref<8x1xf32, #tpu.memory_space<vmem>>, vector<8x1xf32>,
    %c0_i32_20 = arith.constant 0 : i32
    %34 = arith.cmpi eq, %arg1, %c0_i32_20 : i32
    %35 = arith.extui %34 : i1 to i32
    %c0_i32_21 = arith.constant 0 : i32
    %36 = arith.cmpi ne, %35, %c0_i32_21 : i32
    scf.if %36 {
      %c0_22 = arith.constant 0 : index
      %c0_23 = arith.constant 0 : index
      %37 = vector.load %arg7[%c0_22, %c0_23] : memref<8x128xf32, #tpu.memory_space<vmem>>, vector<8x128xf32>
      %c0_24 = arith.constant 0 : index
      %c0_25 = arith.constant 0 : index
      %38 = vector.load %arg6[%c0_24, %c0_25] : memref<8x1xf32, #tpu.memory_space<vmem>>, vector<8x1xf32>
      %39 = vector.broadcast %38 : vector<8x1xf32> to vector<8x128xf32>
      %40 = arith.divf %37, %39 : vector<8x128xf32>
      %c0_26 = arith.constant 0 : index
      %c0_27 = arith.constant 0 : index
      %41 = vector.load %arg4[%c0_26, %c0_27] : memref<8x128xf32, #tpu.memory_space<vmem>>, vector<8x128xf32>
      tpu.vector_store %arg4[%c0_26, %c0_27], %40 {strides = array<i32>} : memref<8x128xf32, #tpu.memory_space<vmem>>, vector<8x128xf32>,
    } else {
    }
    return
  }
  func.func @transform_0(%arg0: i32, %arg1: i32) -> (i32, i32, i32) {
    %c0_i32 = arith.constant 0 : i32
    %c0_i32_0 = arith.constant 0 : i32
    return %arg0, %arg1, %c0_i32 : i32, i32, i32
  }
  func.func @transform_1(%arg0: i32, %arg1: i32) -> (i32, i32) {
    %c0_i32 = arith.constant 0 : i32
    %c0_i32_0 = arith.constant 0 : i32
    %c0_i32_1 = arith.constant 0 : i32
    return %c0_i32, %c0_i32_0 : i32, i32
  }
  func.func @transform_2(%arg0: i32, %arg1: i32) -> (i32, i32) {
    %c0_i32 = arith.constant 0 : i32
    %c0_i32_0 = arith.constant 0 : i32
    return %arg0, %c0_i32 : i32, i32
  }
}

</mosaic_0001>

<llo_original>
// kernel: tpu_custom_call.1
$region0: #{tpu_custom_call.1}
  #allocation0 [shape = 'u32[]', space=smem, size = 0x4, offset = 0x4, fixed_abs, tag = 'smem constant byte address 0x4 - core index']
  #allocation1 [shape = 'u32[144,128]{1,0:T(1,128)}', space=vmem, size = 0x12000, scoped, tag = 'internal scratch']
  #allocation2 [shape = 'f32[8,1]{1,0:T(8,128)}', space=vmem, size = 0x1000, scoped, tag = 'scratch operand']
  #allocation3 [shape = 'f32[8,1]{1,0:T(8,128)}', space=vmem, size = 0x1000, scoped, tag = 'scratch operand']
  #allocation4 [shape = 'f32[8,128]{1,0:T(8,128)}', space=vmem, size = 0x1000, scoped, tag = 'scratch operand']
  %s0 = inlined_call_operand.hbm [shape: f32[8,8,128], index: 0, kind: input, shape index: {}]
  %s1 = inlined_call_operand.vmem [shape: f32[1,128], index: 1, kind: input, shape index: {}]
  %s2 = inlined_call_operand.hbm [shape: f32[8,128], index: 2, kind: output, shape index: {}]
  %s3 = sld [smem:[#allocation0]]
  $region30: #{tpu_custom_call.1} parent=0
    _
  %s5 = ssub.s32 1, %s3
  %s6 = scalar_select 0, %s5, %s3
  $region1: #{tpu_custom_call.1} parent=0
    #allocation5 [shape = 'u8[32768]{0}', space=vmem, size = 0x8000, scoped, tag = 'input window, operand 0, single buffered']
    #allocation6 [shape = 's32[1]{0}', space=sflag, size = 0x4, scoped, tag = 'scoped memory for tpu_custom_call.1']
    #allocation7 [shape = 's32[1]{0}', space=sflag, size = 0x4, scoped, tag = 'scoped memory for tpu_custom_call.1']
    #allocation8 [shape = 'u8[4096]{0}', space=vmem, size = 0x1000, scoped, tag = 'output window, operand 0, single buffered']
    %7 = vsyncpa [#allocation6], 0
    %8 = vsyncpa [#allocation7], 0
    // Predicated region
    $region2: #{tpu_custom_call.1} parent=1 // pred_check
      _
    $region3: #{tpu_custom_call.1} parent=1 // pred_check_branch
      %10 = sbr.rel (0) target = $region5
    $region4: #{tpu_custom_call.1} parent=1 // pred_region
      %s12 = ssub.s32 1024, 1024
      %13 = vsyncadd [#allocation6], %s12
      %s14 = sshll.u32 [#allocation5], 4
      %s15 = int_to_ptr.vmem [resolvable:$true] %s14
      %20 = dma.hbm_to_vmem [thread:$0]  %s0, 1024, %s15, [#allocation6], 128, 128, 8
    $region5: #{tpu_custom_call.1} parent=1 // pred_fallthru
      _
    // Predicated region
    $region6: #{tpu_custom_call.1} parent=1 // pred_check
      _
    $region7: #{tpu_custom_call.1} parent=1 // pred_check_branch
      %22 = sbr.rel (0) target = $region9
    $region8: #{tpu_custom_call.1} parent=1 // pred_region
      _
    $region9: #{tpu_custom_call.1} parent=1 // pred_fallthru
      _
    // Predicated region
    $region10: #{tpu_custom_call.1} parent=1 // pred_check
      _
    $region11: #{tpu_custom_call.1} parent=1 // pred_check_branch
      %24 = sbr.rel (0) target = $region13
    $region12: #{tpu_custom_call.1} parent=1 // pred_region
      %25 = dma.done [#allocation6], 1024
    $region13: #{tpu_custom_call.1} parent=1 // pred_fallthru
      _
    %p26 = scmp.eq.s32.totalorder 0, 0
    // Predicated region
    $region14: #{tpu_custom_call.1} parent=1 // pred_check
      %p27 = pneg %p26
    $region15: #{tpu_custom_call.1} parent=1 // pred_check_branch
      %29 = sbr.rel (%p27) target = $region17
    $region16: #{tpu_custom_call.1} parent=1 // pred_region
      %vm30 = vcmask 7168
      %31 = vst.msk [vmem:[#allocation2] sm:$0xff] %vm30, -inf
      %32 = vst.msk [vmem:[#allocation3] sm:$0xff] %vm30, 0.0
      %33 = vst [vmem:[#allocation4] sm:$0xff] 0.0
    $region17: #{tpu_custom_call.1} parent=1 // pred_fallthru
      _
    %v34 = vld [vmem:[#allocation5] sm:$0xff]
    %v35 = vld [vmem:[#allocation5 + $0x8] sm:$0xff]
    %v36 = vld [vmem:[#allocation5 + $0x10] sm:$0xff]
    %v37 = vld [vmem:[#allocation5 + $0x18] sm:$0xff]
    %v38 = vld [vmem:[#allocation5 + $0x20] sm:$0xff]
    %v39 = vld [vmem:[#allocation5 + $0x28] sm:$0xff]
    %v40 = vld [vmem:[#allocation5 + $0x30] sm:$0xff]
    %v41 = vld [vmem:[#allocation5 + $0x38] sm:$0xff]
    %v42 = vld [vmem:[%s1] sm:$0x1]
    %v44 = vlaneseq
    %v45 = vshrl.u32 %v44, 7
    %v46 = vsub.s32 0, %v45
    %v47 = vrot.slane %v42, %v46
    %v49 = vmul.f32 %v34, %v47
    %v50 = vmul.f32 %v35, %v47
    %v51 = vmul.f32 %v36, %v47
    %v52 = vmul.f32 %v37, %v47
    %v53 = vmul.f32 %v38, %v47
    %v54 = vmul.f32 %v39, %v47
    %v55 = vmul.f32 %v40, %v47
    %v56 = vmul.f32 %v41, %v47
    %57 = vadd.xlane.f32.xlu0 %v49
    %v58 = vpop.xlane.xlu0 %57
    %59 = vadd.xlane.f32.xlu0 %v50
    %v60 = vpop.xlane.xlu0 %59
    %61 = vadd.xlane.f32.xlu0 %v51
    %v62 = vpop.xlane.xlu0 %61
    %63 = vadd.xlane.f32.xlu0 %v52
    %v64 = vpop.xlane.xlu0 %63
    %65 = vadd.xlane.f32.xlu0 %v53
    %v66 = vpop.xlane.xlu0 %65
    %67 = vadd.xlane.f32.xlu0 %v54
    %v68 = vpop.xlane.xlu0 %67
    %69 = vadd.xlane.f32.xlu0 %v55
    %v70 = vpop.xlane.xlu0 %69
    %71 = vadd.xlane.f32.xlu0 %v56
    %v72 = vpop.xlane.xlu0 %71
    %v73 = vld [vmem:[#allocation2] sm:$0xff]
    %v82 = vlaneseq
    %v83 = vand.u32 %v82, 127
    %v84 = vlaneseq
    %v85 = vshrl.u32 %v84, 7
    %v86 = vsub.s32 %v83, %v85
    %v87 = vrot.slane %v58, %v86
    %v88 = vlaneseq
    %v89 = vshrl.u32 %v88, 7
    %v90 = vsub.s32 %v83, %v89
    %v91 = vrot.slane %v60, %v90
    %v92 = vlaneseq
    %v93 = vshrl.u32 %v92, 7
    %v94 = vsub.s32 %v83, %v93
    %v95 = vrot.slane %v62, %v94
    %v96 = vlaneseq
    %v97 = vshrl.u32 %v96, 7
    %v98 = vsub.s32 %v83, %v97
    %v99 = vrot.slane %v64, %v98
    %v100 = vlaneseq
    %v101 = vshrl.u32 %v100, 7
    %v102 = vsub.s32 %v83, %v101
    %v103 = vrot.slane %v66, %v102
    %v104 = vlaneseq
    %v105 = vshrl.u32 %v104, 7
    %v106 = vsub.s32 %v83, %v105
    %v107 = vrot.slane %v68, %v106
    %v108 = vlaneseq
    %v109 = vshrl.u32 %v108, 7
    %v110 = vsub.s32 %v83, %v109
    %v111 = vrot.slane %v70, %v110
    %v112 = vlaneseq
    %v113 = vshrl.u32 %v112, 7
    %v114 = vsub.s32 %v83, %v113
    %v115 = vrot.slane %v72, %v114
    %vm116 = vcmask 1041409
    %v117 = vsel %vm116, %v91, %v87
    %vm118 = vcmask 1042434
    %v119 = vsel %vm118, %v95, %v117
    %vm120 = vcmask 1043459
    %v121 = vsel %vm120, %v99, %v119
    %vm122 = vcmask 1044484
    %v123 = vsel %vm122, %v103, %v121
    %vm124 = vcmask 1045509
    %v125 = vsel %vm124, %v107, %v123
    %vm126 = vcmask 1046534
    %v127 = vsel %vm126, %v111, %v125
    %vm128 = vcmask 1047559
    %v129 = vsel %vm128, %v115, %v127
    %vm131 = vcmask 64512
    %v132 = vsel %vm131, %v129, -inf
    %133 = vmax.xlane.f32.xlu0 %v132
    %v134 = vpop.xlane.xlu0 %133
    %v135 = vmax.f32 %v73, %v134
    %v136 = vsub.f32 %v73, %v135
    %v137 = vmul.f32 %v136, 1.442695
    %v138 = vpow.pop %v137
    %140 = vset.pattern.permute.xlu0 0
    %141 = vperm.xlu0 %140, %v135
    %v142 = vpop.permute.xlu0 %141
    %v143 = vlaneseq
    %v144 = vshrl.u32 %v143, 7
    %v145 = vsub.s32 0, %v144
    %v146 = vrot.slane %v142, %v145
    %v147 = vlaneseq
    %v148 = vshrl.u32 %v147, 7
    %v149 = vsub.s32 1, %v148
    %v150 = vrot.slane %v142, %v149
    %v151 = vlaneseq
    %v152 = vshrl.u32 %v151, 7
    %v153 = vsub.s32 2, %v152
    %v154 = vrot.slane %v142, %v153
    %v155 = vlaneseq
    %v156 = vshrl.u32 %v155, 7
    %v157 = vsub.s32 3, %v156
    %v158 = vrot.slane %v142, %v157
    %v159 = vlaneseq
    %v160 = vshrl.u32 %v159, 7
    %v161 = vsub.s32 4, %v160
    %v162 = vrot.slane %v142, %v161
    %v163 = vlaneseq
    %v164 = vshrl.u32 %v163, 7
    %v165 = vsub.s32 5, %v164
    %v166 = vrot.slane %v142, %v165
    %v167 = vlaneseq
    %v168 = vshrl.u32 %v167, 7
    %v169 = vsub.s32 6, %v168
    %v170 = vrot.slane %v142, %v169
    %v171 = vlaneseq
    %v172 = vshrl.u32 %v171, 7
    %v173 = vsub.s32 7, %v172
    %v174 = vrot.slane %v142, %v173
    %v183 = vsub.f32 %v58, %v146
    %v184 = vsub.f32 %v60, %v150
    %v185 = vsub.f32 %v62, %v154
    %v186 = vsub.f32 %v64, %v158
    %v187 = vsub.f32 %v66, %v162
    %v188 = vsub.f32 %v68, %v166
    %v189 = vsub.f32 %v70, %v170
    %v190 = vsub.f32 %v72, %v174
    %v191 = vmul.f32 %v183, 1.442695
    %v192 = vpow.pop %v191
    %v193 = vmul.f32 %v184, 1.442695
    %v194 = vpow.pop %v193
    %v195 = vmul.f32 %v185, 1.442695
    %v196 = vpow.pop %v195
    %v197 = vmul.f32 %v186, 1.442695
    %v198 = vpow.pop %v197
    %v199 = vmul.f32 %v187, 1.442695
    %v200 = vpow.pop %v199
    %v201 = vmul.f32 %v188, 1.442695
    %v202 = vpow.pop %v201
    %v203 = vmul.f32 %v189, 1.442695
    %v204 = vpow.pop %v203
    %v205 = vmul.f32 %v190, 1.442695
    %v206 = vpow.pop %v205
    %v207 = vld [vmem:[#allocation3] sm:$0xff]
    %v208 = vmul.f32 %v138, %v207
    %217 = vset.pattern.permute.xlu0 0
    %218 = vperm.xlu0 %217, %v192
    %v219 = vpop.permute.xlu0 %218
    %220 = vset.pattern.permute.xlu0 0
    %221 = vperm.xlu0 %220, %v194
    %v222 = vpop.permute.xlu0 %221
    %223 = vset.pattern.permute.xlu0 0
    %224 = vperm.xlu0 %223, %v196
    %v225 = vpop.permute.xlu0 %224
    %226 = vset.pattern.permute.xlu0 0
    %227 = vperm.xlu0 %226, %v198
    %v228 = vpop.permute.xlu0 %227
    %229 = vset.pattern.permute.xlu0 0
    %230 = vperm.xlu0 %229, %v200
    %v231 = vpop.permute.xlu0 %230
    %232 = vset.pattern.permute.xlu0 0
    %233 = vperm.xlu0 %232, %v202
    %v234 = vpop.permute.xlu0 %233
    %235 = vset.pattern.permute.xlu0 0
    %236 = vperm.xlu0 %235, %v204
    %v237 = vpop.permute.xlu0 %236
    %238 = vset.pattern.permute.xlu0 0
    %239 = vperm.xlu0 %238, %v206
    %v240 = vpop.permute.xlu0 %239
    %v241 = vlaneseq
    %v242 = vshrl.u32 %v241, 7
    %v243 = vsub.s32 %v83, %v242
    %v244 = vrot.slane %v219, %v243
    %v245 = vlaneseq
    %v246 = vshrl.u32 %v245, 7
    %v247 = vsub.s32 %v83, %v246
    %v248 = vrot.slane %v222, %v247
    %v249 = vlaneseq
    %v250 = vshrl.u32 %v249, 7
    %v251 = vsub.s32 %v83, %v250
    %v252 = vrot.slane %v225, %v251
    %v253 = vlaneseq
    %v254 = vshrl.u32 %v253, 7
    %v255 = vsub.s32 %v83, %v254
    %v256 = vrot.slane %v228, %v255
    %v257 = vlaneseq
    %v258 = vshrl.u32 %v257, 7
    %v259 = vsub.s32 %v83, %v258
    %v260 = vrot.slane %v231, %v259
    %v261 = vlaneseq
    %v262 = vshrl.u32 %v261, 7
    %v263 = vsub.s32 %v83, %v262
    %v264 = vrot.slane %v234, %v263
    %v265 = vlaneseq
    %v266 = vshrl.u32 %v265, 7
    %v267 = vsub.s32 %v83, %v266
    %v268 = vrot.slane %v237, %v267
    %v269 = vlaneseq
    %v270 = vshrl.u32 %v269, 7
    %v271 = vsub.s32 %v83, %v270
    %v272 = vrot.slane %v240, %v271
    %v273 = vsel %vm116, %v248, %v244
    %v274 = vsel %vm118, %v252, %v273
    %v275 = vsel %vm120, %v256, %v274
    %v276 = vsel %vm122, %v260, %v275
    %v277 = vsel %vm124, %v264, %v276
    %v278 = vsel %vm126, %v268, %v277
    %v279 = vsel %vm128, %v272, %v278
    %v281 = vsel %vm131, %v279, 0.0
    %282 = vadd.xlane.f32.xlu0 %v281
    %v283 = vpop.xlane.xlu0 %282
    %v284 = vadd.f32 %v208, %v283
    %vm285 = vcmask 7168
    %286 = vst.msk [vmem:[#allocation3] sm:$0xff] %vm285, %v284
    %v287 = vld [vmem:[#allocation4] sm:$0xff]
    %289 = vset.pattern.permute.xlu0 0
    %290 = vperm.xlu0 %289, %v138
    %v291 = vpop.permute.xlu0 %290
    %v293 = vmul.f32 %v291, %v287
    %v302 = vmul.f32 %v34, %v219
    %v303 = vmul.f32 %v35, %v222
    %v304 = vmul.f32 %v36, %v225
    %v305 = vmul.f32 %v37, %v228
    %v306 = vmul.f32 %v38, %v231
    %v307 = vmul.f32 %v39, %v234
    %v308 = vmul.f32 %v40, %v237
    %v309 = vmul.f32 %v41, %v240
    %v310 = vrot.slane %v302, 4
    %v311 = vadd.f32 %v302, %v310
    %v312 = vrot.slane %v311, 2
    %v313 = vadd.f32 %v311, %v312
    %v314 = vrot.slane %v313, 1
    %v315 = vadd.f32 %v313, %v314
    %v316 = vrot.slane %v303, 4
    %v317 = vadd.f32 %v303, %v316
    %v318 = vrot.slane %v317, 2
    %v319 = vadd.f32 %v317, %v318
    %v320 = vrot.slane %v319, 1
    %v321 = vadd.f32 %v319, %v320
    %v322 = vrot.slane %v304, 4
    %v323 = vadd.f32 %v304, %v322
    %v324 = vrot.slane %v323, 2
    %v325 = vadd.f32 %v323, %v324
    %v326 = vrot.slane %v325, 1
    %v327 = vadd.f32 %v325, %v326
    %v328 = vrot.slane %v305, 4
    %v329 = vadd.f32 %v305, %v328
    %v330 = vrot.slane %v329, 2
    %v331 = vadd.f32 %v329, %v330
    %v332 = vrot.slane %v331, 1
    %v333 = vadd.f32 %v331, %v332
    %v334 = vrot.slane %v306, 4
    %v335 = vadd.f32 %v306, %v334
    %v336 = vrot.slane %v335, 2
    %v337 = vadd.f32 %v335, %v336
    %v338 = vrot.slane %v337, 1
    %v339 = vadd.f32 %v337, %v338
    %v340 = vrot.slane %v307, 4
    %v341 = vadd.f32 %v307, %v340
    %v342 = vrot.slane %v341, 2
    %v343 = vadd.f32 %v341, %v342
    %v344 = vrot.slane %v343, 1
    %v345 = vadd.f32 %v343, %v344
    %v346 = vrot.slane %v308, 4
    %v347 = vadd.f32 %v308, %v346
    %v348 = vrot.slane %v347, 2
    %v349 = vadd.f32 %v347, %v348
    %v350 = vrot.slane %v349, 1
    %v351 = vadd.f32 %v349, %v350
    %v352 = vrot.slane %v309, 4
    %v353 = vadd.f32 %v309, %v352
    %v354 = vrot.slane %v353, 2
    %v355 = vadd.f32 %v353, %v354
    %v356 = vrot.slane %v355, 1
    %v357 = vadd.f32 %v355, %v356
    %v366 = vsel %vm116, %v321, %v315
    %v367 = vsel %vm118, %v327, %v366
    %v368 = vsel %vm120, %v333, %v367
    %v369 = vsel %vm122, %v339, %v368
    %v370 = vsel %vm124, %v345, %v369
    %v371 = vsel %vm126, %v351, %v370
    %v372 = vsel %vm128, %v357, %v371
    %v374 = vadd.f32 %v293, %v372
    %375 = vst [vmem:[#allocation4] sm:$0xff] %v374
    %376 = vst.msk [vmem:[#allocation2] sm:$0xff] %vm285, %v135
    // Predicated region
    $region18: #{tpu_custom_call.1} parent=1 // pred_check
      %p377 = pneg %p26
    $region19: #{tpu_custom_call.1} parent=1 // pred_check_branch
      %379 = sbr.rel (%p377) target = $region21
    $region20: #{tpu_custom_call.1} parent=1 // pred_region
      %v380 = vld [vmem:[#allocation4] sm:$0xff]
      %v381 = vld [vmem:[#allocation3] sm:$0xff]
      %383 = vset.pattern.permute.xlu0 0
      %384 = vperm.xlu0 %383, %v381
      %v385 = vpop.permute.xlu0 %384
      %v387 = vrcp.pop %v385
      %v388 = vmul.f32 %v380, %v387
      %389 = vst [vmem:[#allocation8] sm:$0xff] %v388
    $region21: #{tpu_custom_call.1} parent=1 // pred_fallthru
      _
    // Predicated region
    $region22: #{tpu_custom_call.1} parent=1 // pred_check
      _
    $region23: #{tpu_custom_call.1} parent=1 // pred_check_branch
      %391 = sbr.rel (0) target = $region25
    $region24: #{tpu_custom_call.1} parent=1 // pred_region
      %s393 = ssub.s32 128, 128
      %394 = vsyncadd [#allocation7], %s393
      %s396 = sshll.u32 [#allocation8], 4
      %s397 = int_to_ptr.vmem [resolvable:$true] %s396
      %399 = dma.vmem_to_hbm [thread:$0]  %s397, 128, %s2, [#allocation7]
    $region25: #{tpu_custom_call.1} parent=1 // pred_fallthru
      _
    // Predicated region
    $region26: #{tpu_custom_call.1} parent=1 // pred_check
      _
    $region27: #{tpu_custom_call.1} parent=1 // pred_check_branch
      %401 = sbr.rel (0) target = $region29
    $region28: #{tpu_custom_call.1} parent=1 // pred_region
      %402 = dma.done [#allocation7], 128
    $region29: #{tpu_custom_call.1} parent=1 // pred_fallthru
      _
    %403 = vsyncpa [#allocation6], 1
    %404 = vsyncpa [#allocation7], 1

</llo_original>
